<compile_context>
chip_gen: v7x
topology: tpu7x:2x2x1
jax: 0.10.0
libtpu: 0.0.40
codegen_flags: <defaults>
</compile_context>

<pallas_src>
import jax
import jax.numpy as jnp
from jax.experimental import pallas as pl
from jax.experimental.pallas import tpu as pltpu


def _round_up(x, m):
    return (x + m - 1) // m * m


def _cdiv(a, b):
    return -(-a // b)


def _pad2(a, rows, cols, dtype):
    """Zero-pad a 2D array to (rows, cols) and cast to dtype."""
    out = jnp.zeros((rows, cols), dtype)
    return out.at[: a.shape[0], : a.shape[1]].set(a.astype(dtype))


def generator_kernel(x_ref, w1_ref, b1_ref, w2_ref, b2_ref, w3_ref, b3_ref, o_ref):
    # Matmuls run on the MXU with f32 accumulation; bias/ReLU/Tanh stay f32 (VPU/EUP).
    x = x_ref[...].astype(w1_ref.dtype)  # cast to bf16 in-kernel (x arrives unpadded f32)
    # Layer 1: Linear + ReLU   (K=32 is a legal bf16 sublane multiple; no K padding needed)
    h = jnp.dot(x, w1_ref[...], preferred_element_type=jnp.float32) + b1_ref[...]
    h = jnp.maximum(h, 0.0)
    # Layer 2: Linear + ReLU
    h = jnp.dot(h.astype(w2_ref.dtype), w2_ref[...], preferred_element_type=jnp.float32) + b2_ref[...]
    h = jnp.maximum(h, 0.0)
    # Output layer: Linear then Tanh (G_out_activation == 'tanh')
    h = jnp.dot(h.astype(w3_ref.dtype), w3_ref[...], preferred_element_type=jnp.float32) + b3_ref[...]
    o_ref[...] = jnp.tanh(h).astype(o_ref.dtype)


def prepare_generator_params(params, matmul_dtype=jnp.bfloat16):
    """One-time weight prep (hoisted out of the per-call path).

    params: w* as (in, out), b* as (1, out), f32.  Weights are the transpose of
    PyTorch nn.Linear's (out, in) layout so the kernel computes x @ W directly.
    Only the N (output-feature) dims are padded to multiples of 128; K of the first
    layer stays at d_in (lane-dense loads, full-rate bf16 MXU either way).
    """
    w1, b1, w2, b2, w3, b3 = (params[k] for k in ("w1", "b1", "w2", "b2", "w3", "b3"))
    d_in, d_h1 = w1.shape
    d_h2, d_out = w2.shape[1], w3.shape[1]
    n1 = _round_up(d_h1, 128)
    n2 = _round_up(d_h2, 128)
    n3 = _round_up(d_out, 128)
    return {
        "w1": _pad2(w1, d_in, n1, matmul_dtype),
        "b1": _pad2(b1, 1, n1, jnp.float32),
        "w2": _pad2(w2, n1, n2, matmul_dtype),
        "b2": _pad2(b2, 1, n2, jnp.float32),
        "w3": _pad2(w3, n2, n3, matmul_dtype),
        "b3": _pad2(b3, 1, n3, jnp.float32),
    }


def generator_forward(x, prepped, *, d_out=None, out_dtype=jnp.float32, max_tile_b=512):
    """x: (B, input_size) f32 (unpadded). prepped: output of prepare_generator_params."""
    B, d_in = x.shape
    w1p, b1p = prepped["w1"], prepped["b1"]
    w2p, b2p = prepped["w2"], prepped["b2"]
    w3p, b3p = prepped["w3"], prepped["b3"]
    assert w1p.shape[0] == d_in, "input feature dim mismatch with prepared params"
    n3 = w3p.shape[1]
    if d_out is None:
        d_out = n3

    # Pad-minimizing batch tiling. Single tile for small B; >=2 tiles otherwise so the
    # "parallel" batch axis can shard across v7x's two TensorCores.
    if B <= 256:
        num_tiles = 1
    else:
        num_tiles = max(2, _cdiv(B, max_tile_b))
    tile_b = max(8, _round_up(_cdiv(B, num_tiles), 8))
    b_pad = tile_b * num_tiles

    if b_pad != B:
        xp = jnp.zeros((b_pad, d_in), x.dtype).at[:B].set(x)
    else:
        xp = x

    # Weights/biases never change across the batch grid: keep them resident in VMEM
    # (untiled, single buffer, no per-step DMA descriptors or double-buffering).
    resident = pl.BlockSpec(memory_space=pltpu.MemorySpace.VMEM)

    grid_spec = pltpu.PrefetchScalarGridSpec(
        num_scalar_prefetch=0,
        grid=(num_tiles,),
        in_specs=[
            pl.BlockSpec((tile_b, d_in), lambda i: (i, 0)),  # x tile (unpadded features)
            resident, resident,                              # w1, b1
            resident, resident,                              # w2, b2
            resident, resident,                              # w3, b3
        ],
        out_specs=pl.BlockSpec((tile_b, n3), lambda i: (i, 0)),
    )
    out = pl.pallas_call(
        generator_kernel,
        out_shape=jax.ShapeDtypeStruct((b_pad, n3), out_dtype),
        grid_spec=grid_spec,
        compiler_params=pltpu.CompilerParams(dimension_semantics=("parallel",)),
    )(xp, w1p, b1p, w2p, b2p, w3p, b3p)

    if b_pad == B and d_out == n3:
        return out  # no post-kernel slice copy
    return out[:B, :d_out]


def init_linear_params(key, dim_in, dim_out):
    # Mimic PyTorch nn.Linear default init: U(-1/sqrt(fan_in), 1/sqrt(fan_in)).
    kw, kb = jax.random.split(key)
    bound = 1.0 / jnp.sqrt(jnp.float32(dim_in))
    # Stored as (in, out): already the transpose of PyTorch's (out, in) weight.
    w = jax.random.uniform(kw, (dim_in, dim_out), jnp.float32, -bound, bound)
    b = jax.random.uniform(kb, (1, dim_out), jnp.float32, -bound, bound)
    return w, b


def reference_forward(x, params, matmul_dtype=jnp.float32):
    c = lambda a: a.astype(matmul_dtype)
    h = jnp.maximum(jnp.dot(c(x), c(params["w1"]), preferred_element_type=jnp.float32) + params["b1"], 0.0)
    h = jnp.maximum(jnp.dot(c(h), c(params["w2"]), preferred_element_type=jnp.float32) + params["b2"], 0.0)
    h = jnp.dot(c(h), c(params["w3"]), preferred_element_type=jnp.float32) + params["b3"]
    return jnp.tanh(h)


if __name__ == "__main__":
    # opts
    noise_dim, num_classes = 24, 8
    input_size = noise_dim + num_classes       # 32
    g_hidden = [64, 128]
    g_output_size = 256
    batch = 16

    key = jax.random.PRNGKey(0)
    kx, k1, k2, k3 = jax.random.split(key, 4)

    x = jax.random.normal(kx, (batch, input_size), jnp.float32)

    w1, b1 = init_linear_params(k1, input_size, g_hidden[0])
    w2, b2 = init_linear_params(k2, g_hidden[0], g_hidden[1])
    w3, b3 = init_linear_params(k3, g_hidden[1], g_output_size)
    params = {"w1": w1, "b1": b1, "w2": w2, "b2": b2, "w3": w3, "b3": b3}

    # One-time weight prep (padding + bf16 cast hoisted out of the forward call).
    prepped = jax.tree_util.tree_map(jax.block_until_ready, prepare_generator_params(params))

    fwd = jax.jit(generator_forward, static_argnames=("d_out", "out_dtype", "max_tile_b"))

    # Small-batch path: single grid step, whole batch in one tile, no padding or slicing.
    out = jax.block_until_ready(fwd(x, prepped))
    assert out.shape == (batch, g_output_size)
    assert out.dtype == jnp.float32

    ref_bf16 = reference_forward(x, params, jnp.bfloat16)   # same bf16-MXU math as kernel
    ref_f32 = reference_forward(x, params, jnp.float32)     # exact f32 reference
    assert jnp.allclose(out, ref_bf16, atol=1e-2, rtol=1e-2), float(jnp.max(jnp.abs(out - ref_bf16)))
    assert jnp.allclose(out, ref_f32, atol=7e-2, rtol=7e-2), float(jnp.max(jnp.abs(out - ref_f32)))

    # Larger, non-multiple batch exercises the pad-minimizing multi-tile grid
    # (B=600 -> 2 tiles of 304 rows, only 8 padded rows vs 168 previously).
    xb = jax.random.normal(jax.random.PRNGKey(1), (600, input_size), jnp.float32)
    outb = jax.block_until_ready(fwd(xb, prepped))
    refb = reference_forward(xb, params, jnp.bfloat16)
    assert outb.shape == (600, g_output_size)
    assert jnp.allclose(outb, refb, atol=1e-2, rtol=1e-2), float(jnp.max(jnp.abs(outb - refb)))

    # Optional bf16 output path (halves the dominant HBM writeback stream).
    out_bf16 = jax.block_until_ready(
        generator_forward(x, prepped, out_dtype=jnp.bfloat16)
    )
    assert out_bf16.dtype == jnp.bfloat16
    assert jnp.allclose(out_bf16.astype(jnp.float32), ref_bf16, atol=2e-2, rtol=2e-2)

    print("KERNEL_OK")
</pallas_src>

<mosaic_0001>
module attributes {stable_mosaic.version = 11 : i64} {
  func.func @generator_kernel(%arg0: i32, %arg1: memref<16x32xf32, #tpu.memory_space<vmem>>, %arg2: memref<32x128xbf16, #tpu.memory_space<vmem>>, %arg3: memref<1x128xf32, #tpu.memory_space<vmem>>, %arg4: memref<128x128xbf16, #tpu.memory_space<vmem>>, %arg5: memref<1x128xf32, #tpu.memory_space<vmem>>, %arg6: memref<128x256xbf16, #tpu.memory_space<vmem>>, %arg7: memref<1x256xf32, #tpu.memory_space<vmem>>, %arg8: memref<16x256xf32, #tpu.memory_space<vmem>>) attributes {dimension_semantics = [#tpu.dimension_semantics<parallel>], iteration_bounds = array<i64: 1>, scalar_prefetch = 0 : i64, scratch_operands = 0 : i64, tpu.core_type = #tpu.core_type<tc>, window_params = [{transform_indices = @transform_0, window_bounds = array<i64: 16, 32>}, {pipeline_mode = #tpu.pipeline_mode<synchronous>, transform_indices = @transform_1, window_bounds = array<i64: 32, 128>}, {pipeline_mode = #tpu.pipeline_mode<synchronous>, transform_indices = @transform_2, window_bounds = array<i64: 1, 128>}, {pipeline_mode = #tpu.pipeline_mode<synchronous>, transform_indices = @transform_3, window_bounds = array<i64: 128, 128>}, {pipeline_mode = #tpu.pipeline_mode<synchronous>, transform_indices = @transform_4, window_bounds = array<i64: 1, 128>}, {pipeline_mode = #tpu.pipeline_mode<synchronous>, transform_indices = @transform_5, window_bounds = array<i64: 128, 256>}, {pipeline_mode = #tpu.pipeline_mode<synchronous>, transform_indices = @transform_6, window_bounds = array<i64: 1, 256>}, {transform_indices = @transform_7, window_bounds = array<i64: 16, 256>}]} {
    %c0 = arith.constant 0 : index
    %c0_0 = arith.constant 0 : index
    %0 = vector.load %arg1[%c0, %c0_0] : memref<16x32xf32, #tpu.memory_space<vmem>>, vector<16x32xf32>
    %1 = arith.truncf %0 : vector<16x32xf32> to vector<16x32xbf16>
    %c0_1 = arith.constant 0 : index
    %c0_2 = arith.constant 0 : index
    %2 = vector.load %arg2[%c0_1, %c0_2] : memref<32x128xbf16, #tpu.memory_space<vmem>>, vector<32x128xbf16>
    %cst = arith.constant dense<0.000000e+00> : vector<16x128xf32>
    %3 = tpu.matmul %1, %2, %cst {dimension_numbers = #tpu.dot_dimension_numbers<[1], [0], [0], [1], [0, 0, 1, 1], [], []>} : vector<16x32xbf16>, vector<32x128xbf16>, vector<16x128xf32> -> vector<16x128xf32>
    %c0_3 = arith.constant 0 : index
    %c0_4 = arith.constant 0 : index
    %4 = vector.load %arg3[%c0_3, %c0_4] : memref<1x128xf32, #tpu.memory_space<vmem>>, vector<1x128xf32>
    %5 = vector.broadcast %4 : vector<1x128xf32> to vector<16x128xf32>
    %6 = arith.addf %3, %5 : vector<16x128xf32>
    %cst_5 = arith.constant 0.000000e+00 : f32
    %7 = vector.broadcast %cst_5 : f32 to vector<16x128xf32>
    %8 = arith.maximumf %6, %7 : vector<16x128xf32>
    %9 = arith.truncf %8 : vector<16x128xf32> to vector<16x128xbf16>
    %c0_6 = arith.constant 0 : index
    %c0_7 = arith.constant 0 : index
    %10 = vector.load %arg4[%c0_6, %c0_7] : memref<128x128xbf16, #tpu.memory_space<vmem>>, vector<128x128xbf16>
    %cst_8 = arith.constant dense<0.000000e+00> : vector<16x128xf32>
    %11 = tpu.matmul %9, %10, %cst_8 {dimension_numbers = #tpu.dot_dimension_numbers<[1], [0], [0], [1], [0, 0, 1, 1], [], []>} : vector<16x128xbf16>, vector<128x128xbf16>, vector<16x128xf32> -> vector<16x128xf32>
    %c0_9 = arith.constant 0 : index
    %c0_10 = arith.constant 0 : index
    %12 = vector.load %arg5[%c0_9, %c0_10] : memref<1x128xf32, #tpu.memory_space<vmem>>, vector<1x128xf32>
    %13 = vector.broadcast %12 : vector<1x128xf32> to vector<16x128xf32>
    %14 = arith.addf %11, %13 : vector<16x128xf32>
    %cst_11 = arith.constant 0.000000e+00 : f32
    %15 = vector.broadcast %cst_11 : f32 to vector<16x128xf32>
    %16 = arith.maximumf %14, %15 : vector<16x128xf32>
    %17 = arith.truncf %16 : vector<16x128xf32> to vector<16x128xbf16>
    %c0_12 = arith.constant 0 : index
    %c0_13 = arith.constant 0 : index
    %18 = vector.load %arg6[%c0_12, %c0_13] : memref<128x256xbf16, #tpu.memory_space<vmem>>, vector<128x256xbf16>
    %cst_14 = arith.constant dense<0.000000e+00> : vector<16x256xf32>
    %19 = tpu.matmul %17, %18, %cst_14 {dimension_numbers = #tpu.dot_dimension_numbers<[1], [0], [0], [1], [0, 0, 1, 1], [], []>} : vector<16x128xbf16>, vector<128x256xbf16>, vector<16x256xf32> -> vector<16x256xf32>
    %c0_15 = arith.constant 0 : index
    %c0_16 = arith.constant 0 : index
    %20 = vector.load %arg7[%c0_15, %c0_16] : memref<1x256xf32, #tpu.memory_space<vmem>>, vector<1x256xf32>
    %21 = vector.broadcast %20 : vector<1x256xf32> to vector<16x256xf32>
    %22 = arith.addf %19, %21 : vector<16x256xf32>
    %23 = math.tanh %22 : vector<16x256xf32>
    %c0_17 = arith.constant 0 : index
    %c0_18 = arith.constant 0 : index
    %24 = vector.load %arg8[%c0_17, %c0_18] : memref<16x256xf32, #tpu.memory_space<vmem>>, vector<16x256xf32>
    tpu.vector_store %arg8[%c0_17, %c0_18], %23 {strides = array<i32>} : memref<16x256xf32, #tpu.memory_space<vmem>>, vector<16x256xf32>,
    return
  }
  func.func @transform_0(%arg0: i32) -> (i32, i32) {
    %c0_i32 = arith.constant 0 : i32
    %c0_i32_0 = arith.constant 0 : i32
    return %arg0, %c0_i32 : i32, i32
  }
  func.func @transform_1(%arg0: i32) -> (i32, i32) {
    %c0_i32 = arith.constant 0 : i32
    %c0_i32_0 = arith.constant 0 : i32
    %c0_i32_1 = arith.constant 0 : i32
    return %c0_i32, %c0_i32_0 : i32, i32
  }
  func.func @transform_2(%arg0: i32) -> (i32, i32) {
    %c0_i32 = arith.constant 0 : i32
    %c0_i32_0 = arith.constant 0 : i32
    %c0_i32_1 = arith.constant 0 : i32
    return %c0_i32, %c0_i32_0 : i32, i32
  }
  func.func @transform_3(%arg0: i32) -> (i32, i32) {
    %c0_i32 = arith.constant 0 : i32
    %c0_i32_0 = arith.constant 0 : i32
    %c0_i32_1 = arith.constant 0 : i32
    return %c0_i32, %c0_i32_0 : i32, i32
  }
  func.func @transform_4(%arg0: i32) -> (i32, i32) {
    %c0_i32 = arith.constant 0 : i32
    %c0_i32_0 = arith.constant 0 : i32
    %c0_i32_1 = arith.constant 0 : i32
    return %c0_i32, %c0_i32_0 : i32, i32
  }
  func.func @transform_5(%arg0: i32) -> (i32, i32) {
    %c0_i32 = arith.constant 0 : i32
    %c0_i32_0 = arith.constant 0 : i32
    %c0_i32_1 = arith.constant 0 : i32
    return %c0_i32, %c0_i32_0 : i32, i32
  }
  func.func @transform_6(%arg0: i32) -> (i32, i32) {
    %c0_i32 = arith.constant 0 : i32
    %c0_i32_0 = arith.constant 0 : i32
    %c0_i32_1 = arith.constant 0 : i32
    return %c0_i32, %c0_i32_0 : i32, i32
  }
  func.func @transform_7(%arg0: i32) -> (i32, i32) {
    %c0_i32 = arith.constant 0 : i32
    %c0_i32_0 = arith.constant 0 : i32
    return %arg0, %c0_i32 : i32, i32
  }
}

</mosaic_0001>

<llo_original>
// kernel: generator_forward.1
$region0: #{generator_forward.1}
  #allocation0 [shape = 'u32[]', space=smem, size = 0x4, offset = 0x4, fixed_abs, tag = 'smem constant byte address 0x4 - core index']
  #allocation1 [shape = 'u32[144,128]{1,0:T(1,128)}', space=vmem, size = 0x12000, scoped, tag = 'internal scratch']
  %s0 = inlined_call_operand.hbm [shape: f32[16,32], index: 0, kind: input, shape index: {}]
  %s1 = inlined_call_operand.hbm [shape: bf16[32,128], index: 1, kind: input, shape index: {}]
  %s2 = inlined_call_operand.vmem [shape: f32[1,128], index: 2, kind: input, shape index: {}]
  %s3 = inlined_call_operand.hbm [shape: bf16[128,128], index: 3, kind: input, shape index: {}]
  %s4 = inlined_call_operand.vmem [shape: f32[1,128], index: 4, kind: input, shape index: {}]
  %s5 = inlined_call_operand.hbm [shape: bf16[128,256], index: 5, kind: input, shape index: {}]
  %s6 = inlined_call_operand.vmem [shape: f32[1,256], index: 6, kind: input, shape index: {}]
  %s7 = inlined_call_operand.hbm [shape: f32[16,256], index: 7, kind: output, shape index: {}]
  %s8 = sld [smem:[#allocation0]]
  $region54: #{generator_forward.1} parent=0
    _
  %s10 = ssub.s32 1, %s8
  %s11 = scalar_select 0, %s10, %s8
  $region1: #{generator_forward.1} parent=0
    #allocation2 [shape = 'u8[8192]{0}', space=vmem, size = 0x2000, scoped, tag = 'input window, operand 0, single buffered']
    #allocation3 [shape = 's32[1]{0}', space=sflag, size = 0x4, scoped, tag = 'scoped memory for generator_forward.1']
    #allocation4 [shape = 's32[1]{0}', space=sflag, size = 0x4, scoped, tag = 'scoped memory for generator_forward.1']
    #allocation5 [shape = 'u8[8192]{0}', space=vmem, size = 0x2000, scoped, tag = 'input window, operand 1, single buffered']
    #allocation6 [shape = 's32[1]{0}', space=sflag, size = 0x4, scoped, tag = 'scoped memory for generator_forward.1']
    #allocation7 [shape = 'u8[32768]{0}', space=vmem, size = 0x8000, scoped, tag = 'input window, operand 3, single buffered']
    #allocation8 [shape = 'u8[65536]{0}', space=vmem, size = 0x10000, scoped, tag = 'input window, operand 5, single buffered']
    #allocation9 [shape = 's32[1]{0}', space=sflag, size = 0x4, scoped, tag = 'scoped memory for generator_forward.1']
    #allocation10 [shape = 'u8[16384]{0}', space=vmem, size = 0x4000, scoped, tag = 'output window, operand 0, single buffered']
    %12 = vsyncpa [#allocation3], 0
    %13 = vsyncpa [#allocation6], 0
    %14 = vsyncpa [#allocation9], 0
    %15 = vsyncpa [#allocation4], 0
    // Predicated region
    $region2: #{generator_forward.1} parent=1 // pred_check
      _
    $region3: #{generator_forward.1} parent=1 // pred_check_branch
      %17 = sbr.rel (0) target = $region5
    $region4: #{generator_forward.1} parent=1 // pred_region
      %s19 = ssub.s32 256, 256
      %20 = vsyncadd [#allocation3], %s19
      %s21 = sshll.u32 [#allocation2], 4
      %s22 = int_to_ptr.vmem [resolvable:$true] %s21
      %27 = dma.hbm_to_vmem [thread:$0]  %s0, 256, %s22, [#allocation3], 128, 128, 8
    $region5: #{generator_forward.1} parent=1 // pred_fallthru
      _
    // Predicated region
    $region6: #{generator_forward.1} parent=1 // pred_check
      _
    $region7: #{generator_forward.1} parent=1 // pred_check_branch
      %29 = sbr.rel (0) target = $region9
    $region8: #{generator_forward.1} parent=1 // pred_region
      %s31 = ssub.s32 256, 256
      %32 = vsyncadd [#allocation6], %s31
      %s33 = sshll.u32 [#allocation5], 4
      %s34 = int_to_ptr.vmem [resolvable:$true] %s33
      %39 = dma.hbm_to_vmem [thread:$0]  %s1, 256, %s34, [#allocation6], 64, 64, 4
    $region9: #{generator_forward.1} parent=1 // pred_fallthru
      _
    // Predicated region
    $region10: #{generator_forward.1} parent=1 // pred_check
      _
    $region11: #{generator_forward.1} parent=1 // pred_check_branch
      %41 = sbr.rel (0) target = $region13
    $region12: #{generator_forward.1} parent=1 // pred_region
      _
    $region13: #{generator_forward.1} parent=1 // pred_fallthru
      _
    // Predicated region
    $region14: #{generator_forward.1} parent=1 // pred_check
      _
    $region15: #{generator_forward.1} parent=1 // pred_check_branch
      %43 = sbr.rel (0) target = $region17
    $region16: #{generator_forward.1} parent=1 // pred_region
      %s45 = ssub.s32 1024, 1024
      %46 = vsyncadd [#allocation6], %s45
      %s47 = sshll.u32 [#allocation7], 4
      %s48 = int_to_ptr.vmem [resolvable:$true] %s47
      %53 = dma.hbm_to_vmem [thread:$0]  %s3, 1024, %s48, [#allocation6], 64, 64, 4
    $region17: #{generator_forward.1} parent=1 // pred_fallthru
      _
    // Predicated region
    $region18: #{generator_forward.1} parent=1 // pred_check
      _
    $region19: #{generator_forward.1} parent=1 // pred_check_branch
      %55 = sbr.rel (0) target = $region21
    $region20: #{generator_forward.1} parent=1 // pred_region
      _
    $region21: #{generator_forward.1} parent=1 // pred_fallthru
      _
    // Predicated region
    $region22: #{generator_forward.1} parent=1 // pred_check
      _
    $region23: #{generator_forward.1} parent=1 // pred_check_branch
      %57 = sbr.rel (0) target = $region25
    $region24: #{generator_forward.1} parent=1 // pred_region
      %s59 = ssub.s32 2048, 2048
      %60 = vsyncadd [#allocation9], %s59
      %s61 = sshll.u32 [#allocation8], 4
      %s62 = int_to_ptr.vmem [resolvable:$true] %s61
      %67 = dma.hbm_to_vmem [thread:$0]  %s5, 2048, %s62, [#allocation9], 128, 128, 8
    $region25: #{generator_forward.1} parent=1 // pred_fallthru
      _
    // Predicated region
    $region26: #{generator_forward.1} parent=1 // pred_check
      _
    $region27: #{generator_forward.1} parent=1 // pred_check_branch
      %69 = sbr.rel (0) target = $region29
    $region28: #{generator_forward.1} parent=1 // pred_region
      _
    $region29: #{generator_forward.1} parent=1 // pred_fallthru
      _
    // Predicated region
    $region30: #{generator_forward.1} parent=1 // pred_check
      _
    $region31: #{generator_forward.1} parent=1 // pred_check_branch
      %71 = sbr.rel (0) target = $region33
    $region32: #{generator_forward.1} parent=1 // pred_region
      %72 = dma.done [#allocation3], 256
    $region33: #{generator_forward.1} parent=1 // pred_fallthru
      _
    // Predicated region
    $region34: #{generator_forward.1} parent=1 // pred_check
      _
    $region35: #{generator_forward.1} parent=1 // pred_check_branch
      %74 = sbr.rel (0) target = $region37
    $region36: #{generator_forward.1} parent=1 // pred_region
      %75 = dma.done [#allocation6], 256
    $region37: #{generator_forward.1} parent=1 // pred_fallthru
      _
    // Predicated region
    $region38: #{generator_forward.1} parent=1 // pred_check
      _
    $region39: #{generator_forward.1} parent=1 // pred_check_branch
      %77 = sbr.rel (0) target = $region41
    $region40: #{generator_forward.1} parent=1 // pred_region
      %78 = dma.done [#allocation6], 1024
    $region41: #{generator_forward.1} parent=1 // pred_fallthru
      _
    // Predicated region
    $region42: #{generator_forward.1} parent=1 // pred_check
      _
    $region43: #{generator_forward.1} parent=1 // pred_check_branch
      %80 = sbr.rel (0) target = $region45
    $region44: #{generator_forward.1} parent=1 // pred_region
      %81 = dma.done [#allocation9], 2048
    $region45: #{generator_forward.1} parent=1 // pred_fallthru
      _
    %v83 = vld [vmem:[#allocation2] sm:$0xff]
    %v84 = vld [vmem:[#allocation2 + $0x8] sm:$0xff]
    %v85 = vpack.c.bf16 %v84, %v83
    %v86 = vld [vmem:[#allocation5] sm:$0xf]
    %v87 = vld [vmem:[#allocation5 + $0x4] sm:$0xf]
    %v88 = vld [vmem:[#allocation5 + $0x8] sm:$0xf]
    %v89 = vld [vmem:[#allocation5 + $0xc] sm:$0xf]
    %v90 = vld [vmem:[%s2] sm:$0x1]
    %v92 = vlaneseq
    %v93 = vshrl.u32 %v92, 7
    %v94 = vsub.s32 0, %v93
    %v95 = vrot.slane %v90, %v94
    %v101 = vunpack.c.l.b16 %v86
    %v102 = vunpack.c.l.b16 %v87
    %v103 = vunpack.c.l.b16 %v88
    %v104 = vunpack.c.l.b16 %v89
    %v105 = vpack.c.b16 %v102, %v101
    %v106 = vpack.c.b16 %v104, %v103
    %vm109 = vcmask 261120
    %v111 = vsel %vm109, %v85, 0
    %113 = vmatprep.subr.bf16.mxu0 0
    %114 = vmatpush1.bf16.msra.mxu0 %v105
    %115 = vmatprep.subr.bf16.mxu0 0
    %116 = vmatpush1.bf16.msra.mxu0 %v106
    %117 = vmatprep.subr.bf16.mxu0 0
    %118 = vmatpush1.bf16.msra.mxu0 0
    %119 = vmatprep.subr.bf16.mxu0 0
    %120 = vmatpush1.bf16.msra.mxu0 0
    %121 = vmatprep.subr.bf16.mxu0 0
    %122 = vmatpush1.bf16.msra.mxu0 0
    %123 = vmatprep.subr.bf16.mxu0 0
    %124 = vmatpush1.bf16.msra.mxu0 0
    %125 = vmatprep.subr.bf16.mxu0 0
    %126 = vmatpush1.bf16.msra.mxu0 0
    %127 = vmatprep.subr.bf16.mxu0 0
    %128 = vmatpush1.bf16.msra.mxu0 0
    %129 = vmatprep.subr.bf16.mxu0 0
    %130 = vmatpush1.bf16.msra.mxu0 0
    %131 = vmatprep.subr.bf16.mxu0 0
    %132 = vmatpush1.bf16.msra.mxu0 0
    %133 = vmatprep.subr.bf16.mxu0 0
    %134 = vmatpush1.bf16.msra.mxu0 0
    %135 = vmatprep.subr.bf16.mxu0 0
    %136 = vmatpush1.bf16.msra.mxu0 0
    %137 = vmatprep.subr.bf16.mxu0 0
    %138 = vmatpush1.bf16.msra.mxu0 0
    %139 = vmatprep.subr.bf16.mxu0 0
    %140 = vmatpush1.bf16.msra.mxu0 0
    %141 = vmatprep.subr.bf16.mxu0 0
    %142 = vmatpush1.bf16.msra.mxu0 0
    %143 = vmatprep.subr.bf16.mxu0 0
    %144 = vmatpush1.bf16.msra.mxu0 0
    %145 = vmatprep.mubr.bf16.mxu0 0
    %146 = vmatmul.mubr.bf16.gmra.mrb[0].mxu0 %v111
    %v147 = vpop.f32.mrb[0].mxu0
    %v148 = vadd.f32 %v95, %v147
    %v149 = vpop.f32.mrb[0].mxu0
    %v150 = vpop.f32.mrb[0].mxu0
    %v151 = vadd.f32 %v95, %v150
    %v152 = vpop.f32.mrb[0].mxu0
    %153 = vdwg.mxu0
    %v154 = vmax.f32 %v148, 0.0
    %v155 = vmax.f32 %v151, 0.0
    %v156 = vpack.c.bf16 %v155, %v154
    %v157 = vld [vmem:[#allocation7] sm:$0xf]
    %v158 = vld [vmem:[#allocation7 + $0x4] sm:$0xf]
    %v159 = vld [vmem:[#allocation7 + $0x8] sm:$0xf]
    %v160 = vld [vmem:[#allocation7 + $0xc] sm:$0xf]
    %v161 = vld [vmem:[#allocation7 + $0x10] sm:$0xf]
    %v162 = vld [vmem:[#allocation7 + $0x14] sm:$0xf]
    %v163 = vld [vmem:[#allocation7 + $0x18] sm:$0xf]
    %v164 = vld [vmem:[#allocation7 + $0x1c] sm:$0xf]
    %v165 = vld [vmem:[#allocation7 + $0x20] sm:$0xf]
    %v166 = vld [vmem:[#allocation7 + $0x24] sm:$0xf]
    %v167 = vld [vmem:[#allocation7 + $0x28] sm:$0xf]
    %v168 = vld [vmem:[#allocation7 + $0x2c] sm:$0xf]
    %v169 = vld [vmem:[#allocation7 + $0x30] sm:$0xf]
    %v170 = vld [vmem:[#allocation7 + $0x34] sm:$0xf]
    %v171 = vld [vmem:[#allocation7 + $0x38] sm:$0xf]
    %v172 = vld [vmem:[#allocation7 + $0x3c] sm:$0xf]
    %v173 = vld [vmem:[%s4] sm:$0x1]
    %v175 = vlaneseq
    %v176 = vshrl.u32 %v175, 7
    %v177 = vsub.s32 0, %v176
    %v178 = vrot.slane %v173, %v177
    %v196 = vunpack.c.l.b16 %v157
    %v197 = vunpack.c.l.b16 %v158
    %v198 = vunpack.c.l.b16 %v159
    %v199 = vunpack.c.l.b16 %v160
    %v200 = vunpack.c.l.b16 %v161
    %v201 = vunpack.c.l.b16 %v162
    %v202 = vunpack.c.l.b16 %v163
    %v203 = vunpack.c.l.b16 %v164
    %v204 = vunpack.c.l.b16 %v165
    %v205 = vunpack.c.l.b16 %v166
    %v206 = vunpack.c.l.b16 %v167
    %v207 = vunpack.c.l.b16 %v168
    %v208 = vunpack.c.l.b16 %v169
    %v209 = vunpack.c.l.b16 %v170
    %v210 = vunpack.c.l.b16 %v171
    %v211 = vunpack.c.l.b16 %v172
    %v212 = vpack.c.b16 %v197, %v196
    %v213 = vpack.c.b16 %v199, %v198
    %v214 = vpack.c.b16 %v201, %v200
    %v215 = vpack.c.b16 %v203, %v202
    %v216 = vpack.c.b16 %v205, %v204
    %v217 = vpack.c.b16 %v207, %v206
    %v218 = vpack.c.b16 %v209, %v208
    %v219 = vpack.c.b16 %v211, %v210
    %228 = vmatprep.subr.bf16.mxu0 0
    %229 = vmatpush1.bf16.msra.mxu0 %v212
    %230 = vmatprep.subr.bf16.mxu0 0
    %231 = vmatpush1.bf16.msra.mxu0 %v213
    %232 = vmatprep.subr.bf16.mxu0 0
    %233 = vmatpush1.bf16.msra.mxu0 %v214
    %234 = vmatprep.subr.bf16.mxu0 0
    %235 = vmatpush1.bf16.msra.mxu0 %v215
    %236 = vmatprep.subr.bf16.mxu0 0
    %237 = vmatpush1.bf16.msra.mxu0 %v216
    %238 = vmatprep.subr.bf16.mxu0 0
    %239 = vmatpush1.bf16.msra.mxu0 %v217
    %240 = vmatprep.subr.bf16.mxu0 0
    %241 = vmatpush1.bf16.msra.mxu0 %v218
    %242 = vmatprep.subr.bf16.mxu0 0
    %243 = vmatpush1.bf16.msra.mxu0 %v219
    %244 = vmatprep.subr.bf16.mxu0 0
    %245 = vmatpush1.bf16.msra.mxu0 0
    %246 = vmatprep.subr.bf16.mxu0 0
    %247 = vmatpush1.bf16.msra.mxu0 0
    %248 = vmatprep.subr.bf16.mxu0 0
    %249 = vmatpush1.bf16.msra.mxu0 0
    %250 = vmatprep.subr.bf16.mxu0 0
    %251 = vmatpush1.bf16.msra.mxu0 0
    %252 = vmatprep.subr.bf16.mxu0 0
    %253 = vmatpush1.bf16.msra.mxu0 0
    %254 = vmatprep.subr.bf16.mxu0 0
    %255 = vmatpush1.bf16.msra.mxu0 0
    %256 = vmatprep.subr.bf16.mxu0 0
    %257 = vmatpush1.bf16.msra.mxu0 0
    %258 = vmatprep.subr.bf16.mxu0 0
    %259 = vmatpush1.bf16.msra.mxu0 0
    %260 = vmatprep.mubr.bf16.mxu0 0
    %261 = vmatmul.mubr.bf16.gmra.mrb[0].mxu0 %v156
    %v262 = vpop.f32.mrb[0].mxu0
    %v263 = vadd.f32 %v178, %v262
    %v264 = vpop.f32.mrb[0].mxu0
    %v265 = vpop.f32.mrb[0].mxu0
    %v266 = vadd.f32 %v178, %v265
    %v267 = vpop.f32.mrb[0].mxu0
    %268 = vdwg.mxu0
    %v269 = vmax.f32 %v263, 0.0
    %v270 = vmax.f32 %v266, 0.0
    %v271 = vpack.c.bf16 %v270, %v269
    %v272 = vld [vmem:[#allocation8] sm:$0xff]
    %v273 = vld [vmem:[#allocation8 + $0x8] sm:$0xff]
    %v274 = vld [vmem:[#allocation8 + $0x10] sm:$0xff]
    %v275 = vld [vmem:[#allocation8 + $0x18] sm:$0xff]
    %v276 = vld [vmem:[#allocation8 + $0x20] sm:$0xff]
    %v277 = vld [vmem:[#allocation8 + $0x28] sm:$0xff]
    %v278 = vld [vmem:[#allocation8 + $0x30] sm:$0xff]
    %v279 = vld [vmem:[#allocation8 + $0x38] sm:$0xff]
    %v280 = vld [vmem:[#allocation8 + $0x40] sm:$0xff]
    %v281 = vld [vmem:[#allocation8 + $0x48] sm:$0xff]
    %v282 = vld [vmem:[#allocation8 + $0x50] sm:$0xff]
    %v283 = vld [vmem:[#allocation8 + $0x58] sm:$0xff]
    %v284 = vld [vmem:[#allocation8 + $0x60] sm:$0xff]
    %v285 = vld [vmem:[#allocation8 + $0x68] sm:$0xff]
    %v286 = vld [vmem:[#allocation8 + $0x70] sm:$0xff]
    %v287 = vld [vmem:[#allocation8 + $0x78] sm:$0xff]
    %v288 = vld [vmem:[%s6] sm:$0x3]
    %v290 = vlaneseq
    %v291 = vshrl.u32 %v290, 7
    %v292 = vsub.s32 0, %v291
    %v293 = vrot.slane %v288, %v292
    %v294 = vlaneseq
    %v295 = vshrl.u32 %v294, 7
    %v296 = vsub.s32 1, %v295
    %v297 = vrot.slane %v288, %v296
    %v316 = vunpack.c.l.b16 %v272
    %v317 = vunpack.c.h.b16 %v272
    %v318 = vunpack.c.l.b16 %v273
    %v319 = vunpack.c.h.b16 %v273
    %v320 = vunpack.c.l.b16 %v274
    %v321 = vunpack.c.h.b16 %v274
    %v322 = vunpack.c.l.b16 %v275
    %v323 = vunpack.c.h.b16 %v275
    %v324 = vunpack.c.l.b16 %v276
    %v325 = vunpack.c.h.b16 %v276
    %v326 = vunpack.c.l.b16 %v277
    %v327 = vunpack.c.h.b16 %v277
    %v328 = vunpack.c.l.b16 %v278
    %v329 = vunpack.c.h.b16 %v278
    %v330 = vunpack.c.l.b16 %v279
    %v331 = vunpack.c.h.b16 %v279
    %v332 = vunpack.c.l.b16 %v280
    %v333 = vunpack.c.h.b16 %v280
    %v334 = vunpack.c.l.b16 %v281
    %v335 = vunpack.c.h.b16 %v281
    %v336 = vunpack.c.l.b16 %v282
    %v337 = vunpack.c.h.b16 %v282
    %v338 = vunpack.c.l.b16 %v283
    %v339 = vunpack.c.h.b16 %v283
    %v340 = vunpack.c.l.b16 %v284
    %v341 = vunpack.c.h.b16 %v284
    %v342 = vunpack.c.l.b16 %v285
    %v343 = vunpack.c.h.b16 %v285
    %v344 = vunpack.c.l.b16 %v286
    %v345 = vunpack.c.h.b16 %v286
    %v346 = vunpack.c.l.b16 %v287
    %v347 = vunpack.c.h.b16 %v287
    %v348 = vpack.c.b16 %v318, %v316
    %v349 = vpack.c.b16 %v319, %v317
    %v350 = vpack.c.b16 %v322, %v320
    %v351 = vpack.c.b16 %v323, %v321
    %v352 = vpack.c.b16 %v326, %v324
    %v353 = vpack.c.b16 %v327, %v325
    %v354 = vpack.c.b16 %v330, %v328
    %v355 = vpack.c.b16 %v331, %v329
    %v356 = vpack.c.b16 %v334, %v332
    %v357 = vpack.c.b16 %v335, %v333
    %v358 = vpack.c.b16 %v338, %v336
    %v359 = vpack.c.b16 %v339, %v337
    %v360 = vpack.c.b16 %v342, %v340
    %v361 = vpack.c.b16 %v343, %v341
    %v362 = vpack.c.b16 %v346, %v344
    %v363 = vpack.c.b16 %v347, %v345
    %380 = vmatprep.subr.bf16.mxu0 %v349
    %381 = vmatpush1.bf16.msra.mxu0 %v348
    %382 = vmatprep.subr.bf16.mxu0 %v351
    %383 = vmatpush1.bf16.msra.mxu0 %v350
    %384 = vmatprep.subr.bf16.mxu0 %v353
    %385 = vmatpush1.bf16.msra.mxu0 %v352
    %386 = vmatprep.subr.bf16.mxu0 %v355
    %387 = vmatpush1.bf16.msra.mxu0 %v354
    %388 = vmatprep.subr.bf16.mxu0 %v357
    %389 = vmatpush1.bf16.msra.mxu0 %v356
    %390 = vmatprep.subr.bf16.mxu0 %v359
    %391 = vmatpush1.bf16.msra.mxu0 %v358
    %392 = vmatprep.subr.bf16.mxu0 %v361
    %393 = vmatpush1.bf16.msra.mxu0 %v360
    %394 = vmatprep.subr.bf16.mxu0 %v363
    %395 = vmatpush1.bf16.msra.mxu0 %v362
    %396 = vmatprep.subr.bf16.mxu0 0
    %397 = vmatpush1.bf16.msra.mxu0 0
    %398 = vmatprep.subr.bf16.mxu0 0
    %399 = vmatpush1.bf16.msra.mxu0 0
    %400 = vmatprep.subr.bf16.mxu0 0
    %401 = vmatpush1.bf16.msra.mxu0 0
    %402 = vmatprep.subr.bf16.mxu0 0
    %403 = vmatpush1.bf16.msra.mxu0 0
    %404 = vmatprep.subr.bf16.mxu0 0
    %405 = vmatpush1.bf16.msra.mxu0 0
    %406 = vmatprep.subr.bf16.mxu0 0
    %407 = vmatpush1.bf16.msra.mxu0 0
    %408 = vmatprep.subr.bf16.mxu0 0
    %409 = vmatpush1.bf16.msra.mxu0 0
    %410 = vmatprep.subr.bf16.mxu0 0
    %411 = vmatpush1.bf16.msra.mxu0 0
    %412 = vmatprep.mubr.bf16.mxu0 0
    %413 = vmatmul.mubr.bf16.gmra.mrb[0].mxu0 %v271
    %v414 = vpop.f32.mrb[0].mxu0
    %v415 = vadd.f32 %v293, %v414
    %v416 = vpop.f32.mrb[0].mxu0
    %v417 = vadd.f32 %v297, %v416
    %v418 = vpop.f32.mrb[0].mxu0
    %v419 = vadd.f32 %v293, %v418
    %v420 = vpop.f32.mrb[0].mxu0
    %v421 = vadd.f32 %v297, %v420
    %422 = vdwg.mxu0
    %v423 = vtanh.pop %v415
    %v424 = vtanh.pop %v417
    %v425 = vtanh.pop %v419
    %v426 = vtanh.pop %v421
    %427 = vst [vmem:[#allocation10] sm:$0xff] %v423
    %428 = vst [vmem:[#allocation10 + $0x8] sm:$0xff] %v424
    %429 = vst [vmem:[#allocation10 + $0x10] sm:$0xff] %v425
    %430 = vst [vmem:[#allocation10 + $0x18] sm:$0xff] %v426
    // Predicated region
    $region46: #{generator_forward.1} parent=1 // pred_check
      _
    $region47: #{generator_forward.1} parent=1 // pred_check_branch
      %432 = sbr.rel (0) target = $region49
    $region48: #{generator_forward.1} parent=1 // pred_region
      %s434 = ssub.s32 512, 512
      %435 = vsyncadd [#allocation4], %s434
      %s436 = sshll.u32 [#allocation10], 4
      %s437 = int_to_ptr.vmem [resolvable:$true] %s436
      %442 = dma.vmem_to_hbm [thread:$0]  %s437, 512, %s7, [#allocation4], 256, 256, 16
    $region49: #{generator_forward.1} parent=1 // pred_fallthru
      _
    // Predicated region
    $region50: #{generator_forward.1} parent=1 // pred_check
      _
    $region51: #{generator_forward.1} parent=1 // pred_check_branch
      %444 = sbr.rel (0) target = $region53
    $region52: #{generator_forward.1} parent=1 // pred_region
      %445 = dma.done [#allocation4], 512
    $region53: #{generator_forward.1} parent=1 // pred_fallthru
      _
    %446 = vsyncpa [#allocation3], 1
    %447 = vsyncpa [#allocation6], 1
    %448 = vsyncpa [#allocation9], 1
    %449 = vsyncpa [#allocation4], 1

</llo_original>
